<compile_context>
chip_gen: v7x
topology: tpu7x:2x2x1
jax: 0.10.0
libtpu: 0.0.40
codegen_flags: <defaults>
</compile_context>

<pallas_src>
import math

import jax
import jax.numpy as jnp
from jax import lax
from jax.experimental import pallas as pl
from jax.experimental.pallas import tpu as pltpu


def _rank_loss_kernel(params_ref, key_col_ref, key_row_ref, x_ref,
                      loss_ref, correct_ref, ssum_ref, smax_ref):
    f32 = jnp.float32

    # Scalar hyper-parameters from SMEM (changing them never retraces).
    ma1 = params_ref[0]          # margin_1 - alpha_1
    ma2 = params_ref[1]          # margin_2 - alpha_2
    a1 = params_ref[2]           # alpha_1
    a2 = params_ref[3]           # alpha_2
    neg_t = params_ref[4]        # -tval
    c1 = params_ref[5]           # exp(tval * alpha_1)
    c2 = params_ref[6]           # exp(tval * alpha_2)

    xv = x_ref[...]
    n, d = xv.shape
    xf = xv.astype(f32)                      # all VPU/EUP math stays f32 (v5e)
    xb = xv.astype(jnp.bfloat16)             # MXU-native contraction operands

    # --- pairwise Euclidean distances --------------------------------------
    # bf16 gram on the MXU (f32 accumulation); squared norms stay f32 so the
    # sq_i + sq_j - 2*gram cancellation remains accurate.  The row-oriented
    # norms come from an MXU ones-contraction instead of an XLU transpose of
    # the (n,1) vector.
    xsq = xf * xf                                                     # (n, d)
    sq_col = jnp.sum(xsq, axis=1, keepdims=True)                      # (n, 1)
    ones8 = jnp.ones((8, d), f32)      # 8 rows keeps the operand sublane-aligned
    sq_row = lax.dot_general(ones8, xsq,
                             (((1,), (1,)), ((), ())),
                             preferred_element_type=f32)[0:1, :]      # (1, n)
    gram = lax.dot_general(xb, xb, (((1,), (1,)), ((), ())),
                           preferred_element_type=f32)                # (n, n)
    dist2 = sq_col + sq_row - 2.0 * gram
    dist = jnp.sqrt(jnp.maximum(dist2, 1e-12))                        # (n, n)

    # --- masks from the packed key (2*target + sub) -------------------------
    k_col = key_col_ref[...]                                          # (n, 1)
    k_row = key_row_ref[...]                                          # (1, n)
    same_id = (k_col >> 1) == (k_row >> 1)
    intra = (k_col & 1) == (k_row & 1)                    # same modality
    diag = (lax.broadcasted_iota(jnp.int32, (n, n), 0)
            == lax.broadcasted_iota(jnp.int32, (n, n), 1))
    is_pos = jnp.logical_and(same_id, jnp.logical_not(diag))  # anchor excluded
    is_neg = jnp.logical_not(same_id)

    # hardest-pos / hardest-neg operands -> fused max reduction further below
    # (diagonal kept in the positives, exactly like the PyTorch forward()).
    BIG = 1e30
    smax_ref[0:n, :] = jnp.where(same_id, dist, -BIG)
    smax_ref[n:2 * n, :] = jnp.where(is_neg, -dist, -BIG)

    # --- fused intra/cross elementwise chain (single branch) ----------------
    a_sel = jnp.where(intra, a1, a2)            # alpha per element
    ma_sel = jnp.where(intra, ma1, ma2)         # margin - alpha per element
    c_sel = jnp.where(intra, c1, c2)            # exp(tval*alpha) per element

    zeros = jnp.zeros_like(dist)
    ap = jnp.where(is_pos, jnp.maximum(dist + ma_sel, 0.0), zeros)
    pos_f = is_pos.astype(f32)
    e = jnp.exp(neg_t * dist)                   # the ONE (n,n) EUP exp
    sel = jnp.logical_and(is_neg, dist < a_sel)
    w = jnp.where(sel, c_sel * e, zeros)        # = exp(tval*(alpha - dist))
    aw = (a_sel - dist) * w

    # --- all 8 masked row-sums in ONE MXU contraction ------------------------
    # Stack the sum operands along sublanes and contract against the (n, 2)
    # modality one-hot: column 0 sums over j with sub_j==0, column 1 over
    # sub_j==1.  This replaces 8 serialized XLU cross-lane reductions.
    ssum_ref[0 * n:1 * n, :] = ap
    ssum_ref[1 * n:2 * n, :] = pos_f
    ssum_ref[2 * n:3 * n, :] = w
    ssum_ref[3 * n:4 * n, :] = aw
    sub_col = k_col & 1                                               # (n, 1)
    g_onehot = (lax.broadcasted_iota(jnp.int32, (n, 2), 1)
                == sub_col).astype(f32)                               # (n, 2)
    sums = lax.dot_general(ssum_ref[...], g_onehot,
                           (((1,), (0,)), ((), ())),
                           preferred_element_type=f32)                # (4n, 2)

    sub_is0 = sub_col == 0                                            # (n, 1)

    def pick(block):        # (n, 2) -> (intra sum, cross sum), each (n, 1)
        col0, col1 = block[:, 0:1], block[:, 1:2]
        return (jnp.where(sub_is0, col0, col1),
                jnp.where(sub_is0, col1, col0))

    ap_i, ap_c = pick(sums[0 * n:1 * n, :])
    cnt_i, cnt_c = pick(sums[1 * n:2 * n, :])
    w_i, w_c = pick(sums[2 * n:3 * n, :])
    aw_i, aw_c = pick(sums[3 * n:4 * n, :])

    eps = 1e-5
    loss_row = (ap_i / (cnt_i + eps) + ap_c / (cnt_c + eps)
                + aw_i / (w_i + eps) + aw_c / (w_c + eps))            # (n, 1)
    loss_ref[0, 0] = jnp.sum(loss_row) * (1.0 / n)

    # --- "correct": hardest-positive vs hardest-negative (ONE fused max) -----
    mx = jnp.max(smax_ref[...], axis=1, keepdims=True)                # (2n, 1)
    dist_ap = mx[0:n, :]
    dist_an = -mx[n:2 * n, :]
    correct_ref[0, 0] = jnp.sum((dist_an >= dist_ap).astype(jnp.int32))


def rank_loss(x, targets, sub, *, margin_1=1.0, margin_2=1.5,
              alpha_1=2.4, alpha_2=2.2, tval=1.0, norm=False):
    """Returns (loss, correct) exactly like Rank_loss.forward."""
    if norm:  # F.normalize(x, dim=1, p=2) equivalent, done in the wrapper.
        x = x / jnp.maximum(jnp.linalg.norm(x, axis=1, keepdims=True), 1e-12)
    n, _ = x.shape
    key = targets.astype(jnp.int32) * 2 + sub.astype(jnp.int32)   # packed key
    key_col = key.reshape(n, 1)
    key_row = key.reshape(1, n)
    # All scalar hyper-parameters (plus the exp(tval*alpha) soft-weight
    # factors, so the kernel only needs ONE big exp) ride in a single SMEM
    # vector: changing them never retraces/recompiles.
    params = jnp.array([margin_1 - alpha_1, margin_2 - alpha_2,
                        alpha_1, alpha_2, -tval,
                        math.exp(tval * alpha_1), math.exp(tval * alpha_2)],
                       jnp.float32)

    # x is passed in its native dtype (bf16 producers halve the HBM->VMEM DMA;
    # the kernel casts to bf16 for the MXU and f32 for everything else).
    loss, correct = pl.pallas_call(
        _rank_loss_kernel,
        out_shape=(
            jax.ShapeDtypeStruct((1, 1), jnp.float32),
            jax.ShapeDtypeStruct((1, 1), jnp.int32),
        ),
        in_specs=[
            pl.BlockSpec(memory_space=pltpu.MemorySpace.SMEM),   # params (7,)
            pl.BlockSpec(memory_space=pltpu.MemorySpace.VMEM),   # key (n,1)
            pl.BlockSpec(memory_space=pltpu.MemorySpace.VMEM),   # key (1,n)
            pl.BlockSpec(memory_space=pltpu.MemorySpace.VMEM),   # x   (n,d)
        ],
        out_specs=(
            pl.BlockSpec(memory_space=pltpu.MemorySpace.SMEM),
            pl.BlockSpec(memory_space=pltpu.MemorySpace.SMEM),
        ),
        scratch_shapes=[
            pltpu.VMEM((4 * n, n), jnp.float32),   # stacked row-sum operands
            pltpu.VMEM((2 * n, n), jnp.float32),   # stacked max/min operands
        ],
    )(params, key_col, key_row, x)
    return loss[0, 0], correct[0, 0]


def _reference(x, targets, sub, m1, m2, a1, a2, tval, *, bf16_gram=False):
    """Pure-JAX reference mirroring the PyTorch Rank_loss semantics.

    bf16_gram=True mirrors the kernel's MXU numerics (bf16 contraction
    operands, f32 norms/accumulation) for a tight check; False is the
    faithful full-f32 PyTorch computation.
    """
    n = x.shape[0]
    xf = x.astype(jnp.float32)
    sq = jnp.sum(xf * xf, axis=1, keepdims=True)
    if bf16_gram:
        xb = x.astype(jnp.bfloat16)
        gram = lax.dot_general(xb, xb, (((1,), (1,)), ((), ())),
                               preferred_element_type=jnp.float32)
    else:
        gram = jnp.dot(xf, xf.T, precision=lax.Precision.HIGHEST)
    dist = jnp.sqrt(jnp.clip(sq + sq.T - 2.0 * gram, 1e-12, None))

    same = targets[:, None] == targets[None, :]
    eye = jnp.eye(n, dtype=bool)
    is_pos = same & ~eye
    is_neg = ~same
    intra = sub[:, None] == sub[None, :]
    cross = ~intra

    mpi, mpc = is_pos & intra, is_pos & cross
    mni, mnc = is_neg & intra, is_neg & cross

    ap_i = jnp.where(mpi, jnp.maximum(dist + (m1 - a1), 0.0), 0.0)
    ap_c = jnp.where(mpc, jnp.maximum(dist + (m2 - a2), 0.0), 0.0)
    loss_ap = (ap_i.sum(1) / (mpi.sum(1) + 1e-5)
               + ap_c.sum(1) / (mpc.sum(1) + 1e-5))

    sel_i = mni & (dist < a1)
    sel_c = mnc & (dist < a2)
    w_i = jnp.where(sel_i, jnp.exp(tval * (a1 - dist)), 0.0)
    w_c = jnp.where(sel_c, jnp.exp(tval * (a2 - dist)), 0.0)
    loss_an = (((a1 - dist) * w_i).sum(1) / (w_i.sum(1) + 1e-5)
               + ((a2 - dist) * w_c).sum(1) / (w_c.sum(1) + 1e-5))

    loss = jnp.mean(loss_ap + loss_an)

    dist_ap = jnp.max(jnp.where(same, dist, -1e30), axis=1)
    dist_an = jnp.min(jnp.where(is_neg, dist, 1e30), axis=1)
    correct = jnp.sum(dist_an >= dist_ap)
    return loss, correct


if __name__ == "__main__":
    batch_size = 4
    n = 2 * batch_size          # 4 RGB samples + 4 IR samples
    d = 32                      # feature dim
    m1, m2, a1, a2, tval = 1.0, 1.5, 2.4, 2.2, 1.0

    key = jax.random.PRNGKey(0)
    x = jax.random.normal(key, (n, d), dtype=jnp.float32)
    # PK-style identities: each sample has intra- and cross-modal pos/neg pairs.
    targets = jnp.array([0, 0, 1, 1, 0, 0, 1, 1], dtype=jnp.int32)
    # modality indicator as built in Rank_loss.__init__
    sub = jnp.array([0] * batch_size + [1] * batch_size, dtype=jnp.int32)

    loss, correct = rank_loss(x, targets, sub, margin_1=m1, margin_2=m2,
                              alpha_1=a1, alpha_2=a2, tval=tval)
    jax.block_until_ready((loss, correct))

    # Tight check against a reference mirroring the kernel's MXU numerics
    # (bf16 gram operands, f32 everything else).
    ref_loss_bf, ref_corr_bf = _reference(x, targets, sub, m1, m2, a1, a2,
                                          tval, bf16_gram=True)
    tol = 1e-3 * max(1.0, abs(float(ref_loss_bf)))
    assert abs(float(loss) - float(ref_loss_bf)) < tol, (loss, ref_loss_bf)
    assert int(correct) == int(ref_corr_bf), (correct, ref_corr_bf)

    # Fidelity check against the faithful full-f32 PyTorch semantics; the only
    # deliberate deviation is the bf16 MXU contraction (per the perf review).
    ref_loss_f32, _ = _reference(x, targets, sub, m1, m2, a1, a2, tval,
                                 bf16_gram=False)
    tol32 = 2e-2 * max(1.0, abs(float(ref_loss_f32)))
    assert abs(float(loss) - float(ref_loss_f32)) < tol32, (loss, ref_loss_f32)

    print("KERNEL_OK")
</pallas_src>

<mosaic_0001>
module attributes {stable_mosaic.version = 11 : i64} {
  func.func @_rank_loss_kernel(%arg0: memref<7xf32, #tpu.memory_space<smem>>, %arg1: memref<8x1xi32, #tpu.memory_space<vmem>>, %arg2: memref<1x8xi32, #tpu.memory_space<vmem>>, %arg3: memref<8x32xf32, #tpu.memory_space<vmem>>, %arg4: memref<1x1xf32, #tpu.memory_space<smem>>, %arg5: memref<1x1xi32, #tpu.memory_space<smem>>, %arg6: memref<32x8xf32, #tpu.memory_space<vmem>>, %arg7: memref<16x8xf32, #tpu.memory_space<vmem>>) attributes {dimension_semantics = [], scalar_prefetch = 0 : i64, scratch_operands = 2 : i64, tpu.core_type = #tpu.core_type<tc>} {
    %c0 = arith.constant 0 : index
    %0 = memref.load %arg0[%c0] : memref<7xf32, #tpu.memory_space<smem>>
    %c1 = arith.constant 1 : index
    %1 = memref.load %arg0[%c1] : memref<7xf32, #tpu.memory_space<smem>>
    %c2 = arith.constant 2 : index
    %2 = memref.load %arg0[%c2] : memref<7xf32, #tpu.memory_space<smem>>
    %c3 = arith.constant 3 : index
    %3 = memref.load %arg0[%c3] : memref<7xf32, #tpu.memory_space<smem>>
    %c4 = arith.constant 4 : index
    %4 = memref.load %arg0[%c4] : memref<7xf32, #tpu.memory_space<smem>>
    %c5 = arith.constant 5 : index
    %5 = memref.load %arg0[%c5] : memref<7xf32, #tpu.memory_space<smem>>
    %c6 = arith.constant 6 : index
    %6 = memref.load %arg0[%c6] : memref<7xf32, #tpu.memory_space<smem>>
    %c0_0 = arith.constant 0 : index
    %c0_1 = arith.constant 0 : index
    %7 = vector.load %arg3[%c0_0, %c0_1] : memref<8x32xf32, #tpu.memory_space<vmem>>, vector<8x32xf32>
    %8 = arith.truncf %7 : vector<8x32xf32> to vector<8x32xbf16>
    %9 = arith.mulf %7, %7 : vector<8x32xf32>
    %cst = arith.constant dense<0.000000e+00> : vector<8xf32>
    %10 = vector.multi_reduction <add>, %9, %cst [1] : vector<8x32xf32> to vector<8xf32>
    %11 = vector.shape_cast %10 : vector<8xf32> to vector<8x1xf32>
    %cst_2 = arith.constant 1.000000e+00 : f32
    %12 = vector.broadcast %cst_2 : f32 to vector<8x32xf32>
    %cst_3 = arith.constant dense<0.000000e+00> : vector<8x8xf32>
    %13 = tpu.matmul %12, %9, %cst_3 {dimension_numbers = #tpu.dot_dimension_numbers<[1], [1], [0], [0], [0, 0, 1, 0], [], []>} : vector<8x32xf32>, vector<8x32xf32>, vector<8x8xf32> -> vector<8x8xf32>
    %14 = vector.extract_strided_slice %13 {offsets = [0, 0], sizes = [1, 8], strides = [1, 1]} : vector<8x8xf32> to vector<1x8xf32>
    %cst_4 = arith.constant dense<0.000000e+00> : vector<8x8xf32>
    %15 = tpu.matmul %8, %8, %cst_4 {dimension_numbers = #tpu.dot_dimension_numbers<[1], [1], [0], [0], [0, 0, 1, 0], [], []>} : vector<8x32xbf16>, vector<8x32xbf16>, vector<8x8xf32> -> vector<8x8xf32>
    %16 = vector.broadcast %11 : vector<8x1xf32> to vector<8x8xf32>
    %17 = vector.broadcast %14 : vector<1x8xf32> to vector<8x8xf32>
    %18 = arith.addf %16, %17 : vector<8x8xf32>
    %cst_5 = arith.constant 2.000000e+00 : f32
    %19 = vector.broadcast %cst_5 : f32 to vector<8x8xf32>
    %20 = arith.mulf %19, %15 : vector<8x8xf32>
    %21 = arith.subf %18, %20 : vector<8x8xf32>
    %cst_6 = arith.constant 9.99999996E-13 : f32
    %22 = vector.broadcast %cst_6 : f32 to vector<8x8xf32>
    %23 = arith.maximumf %21, %22 : vector<8x8xf32>
    %24 = math.sqrt %23 : vector<8x8xf32>
    %c0_7 = arith.constant 0 : index
    %c0_8 = arith.constant 0 : index
    %25 = vector.load %arg1[%c0_7, %c0_8] : memref<8x1xi32, #tpu.memory_space<vmem>>, vector<8x1xi32>
    %c0_9 = arith.constant 0 : index
    %c0_10 = arith.constant 0 : index
    %26 = vector.load %arg2[%c0_9, %c0_10] : memref<1x8xi32, #tpu.memory_space<vmem>>, vector<1x8xi32>
    %c1_i32 = arith.constant 1 : i32
    %27 = vector.broadcast %c1_i32 : i32 to vector<8x1xi32>
    %28 = arith.shrsi %25, %27 : vector<8x1xi32>
    %c1_i32_11 = arith.constant 1 : i32
    %29 = vector.broadcast %c1_i32_11 : i32 to vector<1x8xi32>
    %30 = arith.shrsi %26, %29 : vector<1x8xi32>
    %31 = vector.broadcast %28 : vector<8x1xi32> to vector<8x8xi32>
    %32 = vector.broadcast %30 : vector<1x8xi32> to vector<8x8xi32>
    %33 = arith.cmpi eq, %31, %32 : vector<8x8xi32>
    %c1_i32_12 = arith.constant 1 : i32
    %34 = vector.broadcast %c1_i32_12 : i32 to vector<8x1xi32>
    %35 = arith.andi %25, %34 : vector<8x1xi32>
    %c1_i32_13 = arith.constant 1 : i32
    %36 = vector.broadcast %c1_i32_13 : i32 to vector<1x8xi32>
    %37 = arith.andi %26, %36 : vector<1x8xi32>
    %38 = vector.broadcast %35 : vector<8x1xi32> to vector<8x8xi32>
    %39 = vector.broadcast %37 : vector<1x8xi32> to vector<8x8xi32>
    %40 = arith.cmpi eq, %38, %39 : vector<8x8xi32>
    %41 = tpu.iota {dimensions = array<i32: 0>} : vector<8x8xi32>
    %42 = tpu.iota {dimensions = array<i32: 1>} : vector<8x8xi32>
    %43 = arith.cmpi eq, %41, %42 : vector<8x8xi32>
    %cst_14 = arith.constant dense<true> : vector<8x8xi1>
    %44 = arith.xori %43, %cst_14 : vector<8x8xi1>
    %45 = arith.andi %33, %44 : vector<8x8xi1>
    %cst_15 = arith.constant dense<true> : vector<8x8xi1>
    %46 = arith.xori %33, %cst_15 : vector<8x8xi1>
    %cst_16 = arith.constant -1.000000e+30 : f32
    %47 = vector.broadcast %cst_16 : f32 to vector<8x8xf32>
    %48 = arith.select %33, %24, %47 : vector<8x8xi1>, vector<8x8xf32>
    %c0_17 = arith.constant 0 : index
    %c0_18 = arith.constant 0 : index
    %49 = vector.load %arg7[%c0_17, %c0_18] : memref<16x8xf32, #tpu.memory_space<vmem>>, vector<8x8xf32>
    tpu.vector_store %arg7[%c0_17, %c0_18], %48 {strides = array<i32>} : memref<16x8xf32, #tpu.memory_space<vmem>>, vector<8x8xf32>,
    %cst_19 = arith.constant 0.000000e+00 : f32
    %50 = vector.broadcast %cst_19 : f32 to vector<8x8xf32>
    %51 = arith.subf %50, %24 : vector<8x8xf32>
    %cst_20 = arith.constant -1.000000e+30 : f32
    %52 = vector.broadcast %cst_20 : f32 to vector<8x8xf32>
    %53 = arith.select %46, %51, %52 : vector<8x8xi1>, vector<8x8xf32>
    %c8 = arith.constant 8 : index
    %c0_21 = arith.constant 0 : index
    %54 = vector.load %arg7[%c8, %c0_21] : memref<16x8xf32, #tpu.memory_space<vmem>>, vector<8x8xf32>
    tpu.vector_store %arg7[%c8, %c0_21], %53 {strides = array<i32>} : memref<16x8xf32, #tpu.memory_space<vmem>>, vector<8x8xf32>,
    %55 = vector.broadcast %2 : f32 to vector<8x8xf32>
    %56 = vector.broadcast %3 : f32 to vector<8x8xf32>
    %57 = arith.select %40, %55, %56 : vector<8x8xi1>, vector<8x8xf32>
    %58 = vector.broadcast %0 : f32 to vector<8x8xf32>
    %59 = vector.broadcast %1 : f32 to vector<8x8xf32>
    %60 = arith.select %40, %58, %59 : vector<8x8xi1>, vector<8x8xf32>
    %61 = vector.broadcast %5 : f32 to vector<8x8xf32>
    %62 = vector.broadcast %6 : f32 to vector<8x8xf32>
    %63 = arith.select %40, %61, %62 : vector<8x8xi1>, vector<8x8xf32>
    %cst_22 = arith.constant 0.000000e+00 : f32
    %64 = vector.broadcast %cst_22 : f32 to vector<8x8xf32>
    %65 = arith.addf %24, %60 : vector<8x8xf32>
    %cst_23 = arith.constant 0.000000e+00 : f32
    %66 = vector.broadcast %cst_23 : f32 to vector<8x8xf32>
    %67 = arith.maximumf %65, %66 : vector<8x8xf32>
    %68 = arith.select %45, %67, %64 : vector<8x8xi1>, vector<8x8xf32>
    %69 = arith.extui %45 : vector<8x8xi1> to vector<8x8xi32>
    %70 = arith.sitofp %69 : vector<8x8xi32> to vector<8x8xf32>
    %71 = vector.broadcast %4 : f32 to vector<8x8xf32>
    %72 = arith.mulf %71, %24 : vector<8x8xf32>
    %73 = math.exp %72 : vector<8x8xf32>
    %74 = arith.cmpf olt, %24, %57 : vector<8x8xf32>
    %75 = arith.andi %46, %74 : vector<8x8xi1>
    %76 = arith.mulf %63, %73 : vector<8x8xf32>
    %77 = arith.select %75, %76, %64 : vector<8x8xi1>, vector<8x8xf32>
    %78 = arith.subf %57, %24 : vector<8x8xf32>
    %79 = arith.mulf %78, %77 : vector<8x8xf32>
    %c0_24 = arith.constant 0 : index
    %c0_25 = arith.constant 0 : index
    %80 = vector.load %arg6[%c0_24, %c0_25] : memref<32x8xf32, #tpu.memory_space<vmem>>, vector<8x8xf32>
    tpu.vector_store %arg6[%c0_24, %c0_25], %68 {strides = array<i32>} : memref<32x8xf32, #tpu.memory_space<vmem>>, vector<8x8xf32>,
    %c8_26 = arith.constant 8 : index
    %c0_27 = arith.constant 0 : index
    %81 = vector.load %arg6[%c8_26, %c0_27] : memref<32x8xf32, #tpu.memory_space<vmem>>, vector<8x8xf32>
    tpu.vector_store %arg6[%c8_26, %c0_27], %70 {strides = array<i32>} : memref<32x8xf32, #tpu.memory_space<vmem>>, vector<8x8xf32>,
    %c16 = arith.constant 16 : index
    %c0_28 = arith.constant 0 : index
    %82 = vector.load %arg6[%c16, %c0_28] : memref<32x8xf32, #tpu.memory_space<vmem>>, vector<8x8xf32>
    tpu.vector_store %arg6[%c16, %c0_28], %77 {strides = array<i32>} : memref<32x8xf32, #tpu.memory_space<vmem>>, vector<8x8xf32>,
    %c24 = arith.constant 24 : index
    %c0_29 = arith.constant 0 : index
    %83 = vector.load %arg6[%c24, %c0_29] : memref<32x8xf32, #tpu.memory_space<vmem>>, vector<8x8xf32>
    tpu.vector_store %arg6[%c24, %c0_29], %79 {strides = array<i32>} : memref<32x8xf32, #tpu.memory_space<vmem>>, vector<8x8xf32>,
    %c1_i32_30 = arith.constant 1 : i32
    %84 = vector.broadcast %c1_i32_30 : i32 to vector<8x1xi32>
    %85 = arith.andi %25, %84 : vector<8x1xi32>
    %86 = tpu.iota {dimensions = array<i32: 1>} : vector<8x2xi32>
    %87 = vector.broadcast %85 : vector<8x1xi32> to vector<8x2xi32>
    %88 = arith.cmpi eq, %86, %87 : vector<8x2xi32>
    %89 = arith.extui %88 : vector<8x2xi1> to vector<8x2xi32>
    %90 = arith.sitofp %89 : vector<8x2xi32> to vector<8x2xf32>
    %c0_31 = arith.constant 0 : index
    %c0_32 = arith.constant 0 : index
    %91 = vector.load %arg6[%c0_31, %c0_32] : memref<32x8xf32, #tpu.memory_space<vmem>>, vector<32x8xf32>
    %cst_33 = arith.constant dense<0.000000e+00> : vector<32x2xf32>
    %92 = tpu.matmul %91, %90, %cst_33 {dimension_numbers = #tpu.dot_dimension_numbers<[1], [0], [0], [1], [0, 0, 1, 1], [], []>} : vector<32x8xf32>, vector<8x2xf32>, vector<32x2xf32> -> vector<32x2xf32>
    %c0_i32 = arith.constant 0 : i32
    %93 = vector.broadcast %c0_i32 : i32 to vector<8x1xi32>
    %94 = arith.cmpi eq, %85, %93 : vector<8x1xi32>
    %95 = vector.extract_strided_slice %92 {offsets = [0, 0], sizes = [8, 2], strides = [1, 1]} : vector<32x2xf32> to vector<8x2xf32>
    %96 = vector.extract_strided_slice %95 {offsets = [0, 0], sizes = [8, 1], strides = [1, 1]} : vector<8x2xf32> to vector<8x1xf32>
    %97 = vector.extract_strided_slice %95 {offsets = [0, 1], sizes = [8, 1], strides = [1, 1]} : vector<8x2xf32> to vector<8x1xf32>
    %98 = arith.select %94, %96, %97 : vector<8x1xi1>, vector<8x1xf32>
    %99 = arith.select %94, %97, %96 : vector<8x1xi1>, vector<8x1xf32>
    %100 = vector.extract_strided_slice %92 {offsets = [8, 0], sizes = [8, 2], strides = [1, 1]} : vector<32x2xf32> to vector<8x2xf32>
    %101 = vector.extract_strided_slice %100 {offsets = [0, 0], sizes = [8, 1], strides = [1, 1]} : vector<8x2xf32> to vector<8x1xf32>
    %102 = vector.extract_strided_slice %100 {offsets = [0, 1], sizes = [8, 1], strides = [1, 1]} : vector<8x2xf32> to vector<8x1xf32>
    %103 = arith.select %94, %101, %102 : vector<8x1xi1>, vector<8x1xf32>
    %104 = arith.select %94, %102, %101 : vector<8x1xi1>, vector<8x1xf32>
    %105 = vector.extract_strided_slice %92 {offsets = [16, 0], sizes = [8, 2], strides = [1, 1]} : vector<32x2xf32> to vector<8x2xf32>
    %106 = vector.extract_strided_slice %105 {offsets = [0, 0], sizes = [8, 1], strides = [1, 1]} : vector<8x2xf32> to vector<8x1xf32>
    %107 = vector.extract_strided_slice %105 {offsets = [0, 1], sizes = [8, 1], strides = [1, 1]} : vector<8x2xf32> to vector<8x1xf32>
    %108 = arith.select %94, %106, %107 : vector<8x1xi1>, vector<8x1xf32>
    %109 = arith.select %94, %107, %106 : vector<8x1xi1>, vector<8x1xf32>
    %110 = vector.extract_strided_slice %92 {offsets = [24, 0], sizes = [8, 2], strides = [1, 1]} : vector<32x2xf32> to vector<8x2xf32>
    %111 = vector.extract_strided_slice %110 {offsets = [0, 0], sizes = [8, 1], strides = [1, 1]} : vector<8x2xf32> to vector<8x1xf32>
    %112 = vector.extract_strided_slice %110 {offsets = [0, 1], sizes = [8, 1], strides = [1, 1]} : vector<8x2xf32> to vector<8x1xf32>
    %113 = arith.select %94, %111, %112 : vector<8x1xi1>, vector<8x1xf32>
    %114 = arith.select %94, %112, %111 : vector<8x1xi1>, vector<8x1xf32>
    %cst_34 = arith.constant 9.99999974E-6 : f32
    %115 = vector.broadcast %cst_34 : f32 to vector<8x1xf32>
    %116 = arith.addf %103, %115 : vector<8x1xf32>
    %117 = arith.divf %98, %116 : vector<8x1xf32>
    %cst_35 = arith.constant 9.99999974E-6 : f32
    %118 = vector.broadcast %cst_35 : f32 to vector<8x1xf32>
    %119 = arith.addf %104, %118 : vector<8x1xf32>
    %120 = arith.divf %99, %119 : vector<8x1xf32>
    %121 = arith.addf %117, %120 : vector<8x1xf32>
    %cst_36 = arith.constant 9.99999974E-6 : f32
    %122 = vector.broadcast %cst_36 : f32 to vector<8x1xf32>
    %123 = arith.addf %108, %122 : vector<8x1xf32>
    %124 = arith.divf %113, %123 : vector<8x1xf32>
    %125 = arith.addf %121, %124 : vector<8x1xf32>
    %cst_37 = arith.constant 9.99999974E-6 : f32
    %126 = vector.broadcast %cst_37 : f32 to vector<8x1xf32>
    %127 = arith.addf %109, %126 : vector<8x1xf32>
    %128 = arith.divf %114, %127 : vector<8x1xf32>
    %129 = arith.addf %125, %128 : vector<8x1xf32>
    %130 = vector.shape_cast %129 : vector<8x1xf32> to vector<1x8x1xf32>
    %cst_38 = arith.constant dense<0.000000e+00> : vector<1xf32>
    %131 = vector.multi_reduction <add>, %130, %cst_38 [1, 2] : vector<1x8x1xf32> to vector<1xf32>
    %132 = vector.shape_cast %131 : vector<1xf32> to vector<1x1x1xf32>
    %133 = vector.extract %132[0, 0, 0] : f32 from vector<1x1x1xf32>
    %cst_39 = arith.constant 1.250000e-01 : f32
    %134 = arith.mulf %133, %cst_39 : f32
    %c0_40 = arith.constant 0 : index
    %c0_41 = arith.constant 0 : index
    %135 = memref.load %arg4[%c0_40, %c0_41] : memref<1x1xf32, #tpu.memory_space<smem>>
    memref.store %134, %arg4[%c0_40, %c0_41] : memref<1x1xf32, #tpu.memory_space<smem>>
    %c0_42 = arith.constant 0 : index
    %c0_43 = arith.constant 0 : index
    %136 = vector.load %arg7[%c0_42, %c0_43] : memref<16x8xf32, #tpu.memory_space<vmem>>, vector<16x8xf32>
    %cst_44 = arith.constant dense<0xFF800000> : vector<16xf32>
    %137 = vector.multi_reduction <maximumf>, %136, %cst_44 [1] : vector<16x8xf32> to vector<16xf32>
    %138 = vector.shape_cast %137 : vector<16xf32> to vector<16x1xf32>
    %139 = vector.extract_strided_slice %138 {offsets = [0, 0], sizes = [8, 1], strides = [1, 1]} : vector<16x1xf32> to vector<8x1xf32>
    %140 = vector.extract_strided_slice %138 {offsets = [8, 0], sizes = [8, 1], strides = [1, 1]} : vector<16x1xf32> to vector<8x1xf32>
    %cst_45 = arith.constant 0.000000e+00 : f32
    %141 = vector.broadcast %cst_45 : f32 to vector<8x1xf32>
    %142 = arith.subf %141, %140 : vector<8x1xf32>
    %143 = arith.cmpf oge, %142, %139 : vector<8x1xf32>
    %144 = arith.extui %143 : vector<8x1xi1> to vector<8x1xi32>
    %145 = vector.shape_cast %144 : vector<8x1xi32> to vector<1x8x1xi32>
    %cst_46 = arith.constant dense<0> : vector<1xi32>
    %146 = vector.multi_reduction <add>, %145, %cst_46 [1, 2] : vector<1x8x1xi32> to vector<1xi32>
    %147 = vector.shape_cast %146 : vector<1xi32> to vector<1x1x1xi32>
    %148 = vector.extract %147[0, 0, 0] : i32 from vector<1x1x1xi32>
    %c0_47 = arith.constant 0 : index
    %c0_48 = arith.constant 0 : index
    %149 = memref.load %arg5[%c0_47, %c0_48] : memref<1x1xi32, #tpu.memory_space<smem>>
    memref.store %148, %arg5[%c0_47, %c0_48] : memref<1x1xi32, #tpu.memory_space<smem>>
    return
  }
}

</mosaic_0001>

<llo_original>
// kernel: tpu_custom_call.1
$region0: #{tpu_custom_call.1}
  #allocation0 [shape = 'u32[]', space=smem, size = 0x4, offset = 0x4, fixed_abs, tag = 'smem constant byte address 0x4 - core index']
  #allocation1 [shape = 'u32[144,128]{1,0:T(1,128)}', space=vmem, size = 0x12000, scoped, tag = 'internal scratch']
  #allocation2 [shape = 'f32[32,8]{1,0:T(8,128)}', space=vmem, size = 0x4000, scoped, tag = 'scratch operand']
  #allocation3 [shape = 'f32[16,8]{1,0:T(8,128)}', space=vmem, size = 0x2000, scoped, tag = 'scratch operand']
  %s0 = inlined_call_operand.vmem [shape: f32[7], index: 0, kind: input, shape index: {}]
  %s1 = inlined_call_operand.vmem [shape: s32[8,1], index: 1, kind: input, shape index: {}]
  %s2 = inlined_call_operand.vmem [shape: s32[1,8], index: 2, kind: input, shape index: {}]
  %s3 = inlined_call_operand.vmem [shape: f32[8,32], index: 3, kind: input, shape index: {}]
  %s4 = inlined_call_operand.hbm [shape: f32[1,1], index: 4, kind: output, shape index: {0}]
  %s5 = inlined_call_operand.hbm [shape: s32[1,1], index: 5, kind: output, shape index: {1}]
  %6 = xla_tuple %s4, %s5
  %s7 = sld [smem:[#allocation0]]
  $region38: #{tpu_custom_call.1} parent=0
    _
  %s9 = ssub.s32 1, %s7
  %s10 = scalar_select 0, %s9, %s7
  $region1: #{tpu_custom_call.1} parent=0
    #allocation4 [shape = 'u8[512]{0}', space=smem, size = 0x200, scoped, tag = 'input window, operand 0, single buffered']
    #allocation5 [shape = 's32[1]{0}', space=sflag, size = 0x4, scoped, tag = 'scoped memory for tpu_custom_call.1']
    #allocation6 [shape = 's32[1]{0}', space=sflag, size = 0x4, scoped, tag = 'scoped memory for tpu_custom_call.1']
    #allocation7 [shape = 'u8[512]{0}', space=smem, size = 0x200, scoped, tag = 'output window, operand 0, single buffered']
    #allocation8 [shape = 'u8[512]{0}', space=smem, size = 0x200, scoped, tag = 'output window, operand 1, single buffered']
    #allocation9 [shape = 's32[1]{0}', space=sflag, size = 0x4, scoped, tag = 'scoped memory for tpu_custom_call.1']
    %11 = vsyncpa [#allocation6], 0
    %12 = vsyncpa [#allocation5], 0
    %13 = vsyncpa [#allocation9], 0
    // Predicated region
    $region2: #{tpu_custom_call.1} parent=1 // pred_check
      _
    $region3: #{tpu_custom_call.1} parent=1 // pred_check_branch
      %15 = sbr.rel (0) target = $region5
    $region4: #{tpu_custom_call.1} parent=1 // pred_region
      %s17 = ssub.s32 16, 16
      %18 = vsyncadd [#allocation6], %s17
      %s20 = sshll.u32 %s0, 4
      %s21 = int_to_ptr.vmem [resolvable:$true] %s20
      %23 = dma.vmem_to_smem %s21, 16, [#allocation4], [#allocation6]
    $region5: #{tpu_custom_call.1} parent=1 // pred_fallthru
      _
    // Predicated region
    $region6: #{tpu_custom_call.1} parent=1 // pred_check
      _
    $region7: #{tpu_custom_call.1} parent=1 // pred_check_branch
      %25 = sbr.rel (0) target = $region9
    $region8: #{tpu_custom_call.1} parent=1 // pred_region
      _
    $region9: #{tpu_custom_call.1} parent=1 // pred_fallthru
      _
    // Predicated region
    $region10: #{tpu_custom_call.1} parent=1 // pred_check
      _
    $region11: #{tpu_custom_call.1} parent=1 // pred_check_branch
      %27 = sbr.rel (0) target = $region13
    $region12: #{tpu_custom_call.1} parent=1 // pred_region
      _
    $region13: #{tpu_custom_call.1} parent=1 // pred_fallthru
      _
    // Predicated region
    $region14: #{tpu_custom_call.1} parent=1 // pred_check
      _
    $region15: #{tpu_custom_call.1} parent=1 // pred_check_branch
      %29 = sbr.rel (0) target = $region17
    $region16: #{tpu_custom_call.1} parent=1 // pred_region
      _
    $region17: #{tpu_custom_call.1} parent=1 // pred_fallthru
      _
    // Predicated region
    $region18: #{tpu_custom_call.1} parent=1 // pred_check
      _
    $region19: #{tpu_custom_call.1} parent=1 // pred_check_branch
      %31 = sbr.rel (0) target = $region21
    $region20: #{tpu_custom_call.1} parent=1 // pred_region
      %32 = dma.done [#allocation6], 16
    $region21: #{tpu_custom_call.1} parent=1 // pred_fallthru
      _
    %33 = sfence
    %s35 = sld [smem:[#allocation4]]
    %s36 = sld [smem:[#allocation4 + $0x1]]
    %s37 = sld [smem:[#allocation4 + $0x2]]
    %s38 = sld [smem:[#allocation4 + $0x3]]
    %s39 = sld [smem:[#allocation4 + $0x4]]
    %s40 = sld [smem:[#allocation4 + $0x5]]
    %s41 = sld [smem:[#allocation4 + $0x6]]
    %v42 = vld [vmem:[%s3] sm:$0xff]
    %v43 = vpack.c.bf16 %v42, %v42
    %v44 = vmul.f32 %v42, %v42
    %vm45 = vcmask 261120
    %v46 = vsel %vm45, %v44, 0.0
    %47 = vadd.xlane.f32.xlu0 %v46
    %v48 = vpop.xlane.xlu0 %47
    %v50 = vsel %vm45, 1.0, 0
    %v53 = vsel %vm45, %v44, 0
    %55 = vmatprep.subr.mxu0 0.0
    %56 = vmatpush1.xpose.msra.mxu0 %v53
    %57 = vmatprep.subr.mxu0 0.0
    %58 = vmatpush1.xpose.msra.mxu0 0.0
    %59 = vmatprep.subr.mxu0 0.0
    %60 = vmatpush1.xpose.msra.mxu0 0.0
    %61 = vmatprep.subr.mxu0 0.0
    %62 = vmatpush1.xpose.msra.mxu0 0.0
    %63 = vmatprep.subr.mxu0 0.0
    %64 = vmatpush1.xpose.msra.mxu0 0.0
    %65 = vmatprep.subr.mxu0 0.0
    %66 = vmatpush1.xpose.msra.mxu0 0.0
    %67 = vmatprep.subr.mxu0 0.0
    %68 = vmatpush1.xpose.msra.mxu0 0.0
    %69 = vmatprep.subr.mxu0 0.0
    %70 = vmatpush1.xpose.msra.mxu0 0.0
    %71 = vmatprep.subr.mxu0 0.0
    %72 = vmatpush1.xpose.msra.mxu0 0.0
    %73 = vmatprep.subr.mxu0 0.0
    %74 = vmatpush1.xpose.msra.mxu0 0.0
    %75 = vmatprep.subr.mxu0 0.0
    %76 = vmatpush1.xpose.msra.mxu0 0.0
    %77 = vmatprep.subr.mxu0 0.0
    %78 = vmatpush1.xpose.msra.mxu0 0.0
    %79 = vmatprep.subr.mxu0 0.0
    %80 = vmatpush1.xpose.msra.mxu0 0.0
    %81 = vmatprep.subr.mxu0 0.0
    %82 = vmatpush1.xpose.msra.mxu0 0.0
    %83 = vmatprep.subr.mxu0 0.0
    %84 = vmatpush1.xpose.msra.mxu0 0.0
    %85 = vmatprep.subr.mxu0 0.0
    %86 = vmatpush1.xpose.msra.mxu0 0.0
    %87 = vmatprep.subr.mxu0 0.0
    %88 = vmatpush1.xpose.msra.mxu0 0.0
    %89 = vmatprep.subr.mxu0 0.0
    %90 = vmatpush1.xpose.msra.mxu0 0.0
    %91 = vmatprep.subr.mxu0 0.0
    %92 = vmatpush1.xpose.msra.mxu0 0.0
    %93 = vmatprep.subr.mxu0 0.0
    %94 = vmatpush1.xpose.msra.mxu0 0.0
    %95 = vmatprep.subr.mxu0 0.0
    %96 = vmatpush1.xpose.msra.mxu0 0.0
    %97 = vmatprep.subr.mxu0 0.0
    %98 = vmatpush1.xpose.msra.mxu0 0.0
    %99 = vmatprep.subr.mxu0 0.0
    %100 = vmatpush1.xpose.msra.mxu0 0.0
    %101 = vmatprep.subr.mxu0 0.0
    %102 = vmatpush1.xpose.msra.mxu0 0.0
    %103 = vmatprep.subr.mxu0 0.0
    %104 = vmatpush1.xpose.msra.mxu0 0.0
    %105 = vmatprep.subr.mxu0 0.0
    %106 = vmatpush1.xpose.msra.mxu0 0.0
    %107 = vmatprep.subr.mxu0 0.0
    %108 = vmatpush1.xpose.msra.mxu0 0.0
    %109 = vmatprep.subr.mxu0 0.0
    %110 = vmatpush1.xpose.msra.mxu0 0.0
    %111 = vmatprep.subr.mxu0 0.0
    %112 = vmatpush1.xpose.msra.mxu0 0.0
    %113 = vmatprep.subr.mxu0 0.0
    %114 = vmatpush1.xpose.msra.mxu0 0.0
    %115 = vmatprep.subr.mxu0 0.0
    %116 = vmatpush1.xpose.msra.mxu0 0.0
    %117 = vmatprep.subr.mxu0 0.0
    %118 = vmatpush1.xpose.msra.mxu0 0.0
    %119 = vmatprep.mubr.f32.mxu0 0.0
    %120 = vmatmul.mubr.f32.gmra.mrb[0].mxu0 %v50
    %v121 = vpop.f32.mrb[0].mxu0
    %v122 = vadd.f32 0.0, %v121
    %v123 = vpop.f32.mrb[0].mxu0
    %124 = vdwg.mxu0
    %v126 = vsel %vm45, %v43, 0
    %128 = vmatprep.subr.bf16.mxu0 0
    %129 = vmatpush1.bf16.xpose.msra.mxu0 %v126
    %130 = vmatprep.subr.bf16.mxu0 0
    %131 = vmatpush1.bf16.xpose.msra.mxu0 0
    %132 = vmatprep.subr.bf16.mxu0 0
    %133 = vmatpush1.bf16.xpose.msra.mxu0 0
    %134 = vmatprep.subr.bf16.mxu0 0
    %135 = vmatpush1.bf16.xpose.msra.mxu0 0
    %136 = vmatprep.subr.bf16.mxu0 0
    %137 = vmatpush1.bf16.xpose.msra.mxu0 0
    %138 = vmatprep.subr.bf16.mxu0 0
    %139 = vmatpush1.bf16.xpose.msra.mxu0 0
    %140 = vmatprep.subr.bf16.mxu0 0
    %141 = vmatpush1.bf16.xpose.msra.mxu0 0
    %142 = vmatprep.subr.bf16.mxu0 0
    %143 = vmatpush1.bf16.xpose.msra.mxu0 0
    %144 = vmatprep.subr.bf16.mxu0 0
    %145 = vmatpush1.bf16.xpose.msra.mxu0 0
    %146 = vmatprep.subr.bf16.mxu0 0
    %147 = vmatpush1.bf16.xpose.msra.mxu0 0
    %148 = vmatprep.subr.bf16.mxu0 0
    %149 = vmatpush1.bf16.xpose.msra.mxu0 0
    %150 = vmatprep.subr.bf16.mxu0 0
    %151 = vmatpush1.bf16.xpose.msra.mxu0 0
    %152 = vmatprep.subr.bf16.mxu0 0
    %153 = vmatpush1.bf16.xpose.msra.mxu0 0
    %154 = vmatprep.subr.bf16.mxu0 0
    %155 = vmatpush1.bf16.xpose.msra.mxu0 0
    %156 = vmatprep.subr.bf16.mxu0 0
    %157 = vmatpush1.bf16.xpose.msra.mxu0 0
    %158 = vmatprep.subr.bf16.mxu0 0
    %159 = vmatpush1.bf16.xpose.msra.mxu0 0
    %160 = vmatprep.mubr.bf16.mxu0 0
    %161 = vmatmul.mubr.bf16.gmra.mrb[0].mxu0 %v126
    %v162 = vpop.f32.mrb[0].mxu0
    %v163 = vadd.f32 0.0, %v162
    %v164 = vpop.f32.mrb[0].mxu0
    %v165 = vpop.f32.mrb[0].mxu0
    %v166 = vpop.f32.mrb[0].mxu0
    %167 = vdwg.mxu0
    %v168 = vlaneseq
    %v169 = vshrl.u32 %v168, 7
    %v170 = vsub.s32 0, %v169
    %v171 = vrot.slane %v122, %v170
    %v172 = vadd.f32 %v48, %v171
    %v173 = vmul.f32 %v163, 2.0
    %v174 = vsub.f32 %v172, %v173
    %v175 = vmax.f32 %v174, 1e-12
    %v176 = vrsqrt.pop %v175
    %v177 = vmul.f32 %v175, %v176
    %vm178 = vcmp.eq.f32.partialorder %v175, inf
    %v179 = vsel %vm178, %v175, %v177
    %vm180 = vcmp.eq.f32.partialorder %v175, 0.0
    %v181 = vand.u32 %v175, 2147483648
    %v182 = vsel %vm180, %v181, %v179
    %v183 = vld [vmem:[%s1] sm:$0xff]
    %v184 = vld [vmem:[%s2] sm:$0x1]
    %v185 = vshra.s32 %v183, 1
    %v186 = vshra.s32 %v184, 1
    %187 = vset.pattern.permute.xlu0 0
    %188 = vperm.xlu0 %187, %v185
    %v189 = vpop.permute.xlu0 %188
    %v190 = vlaneseq
    %v191 = vshrl.u32 %v190, 7
    %v192 = vsub.s32 0, %v191
    %v193 = vrot.slane %v186, %v192
    %vm194 = vcmp.eq.s32.totalorder %v189, %v193
    %v195 = vand.u32 %v183, 1
    %v196 = vand.u32 %v184, 1
    %197 = vset.pattern.permute.xlu0 0
    %198 = vperm.xlu0 %197, %v195
    %v199 = vpop.permute.xlu0 %198
    %v200 = vlaneseq
    %v201 = vshrl.u32 %v200, 7
    %v202 = vsub.s32 0, %v201
    %v203 = vrot.slane %v196, %v202
    %vm204 = vcmp.eq.s32.totalorder %v199, %v203
    %v205 = vlaneseq
    %v206 = vshrl.u32 %v205, 7
    %v207 = vlaneseq
    %v208 = vand.u32 %v207, 127
    %vm209 = vcmp.eq.s32.totalorder %v206, %v208
    %vm210 = vmxor %vm209, 1
    %vm211 = vmand %vm194, %vm210
    %vm212 = vmxor %vm194, 1
    %v213 = vsel %vm194, %v182, -1e+30
    %vm214 = vcmask 64512
    %215 = vst.msk [vmem:[#allocation3] sm:$0xff] %vm214, %v213
    %v216 = vsub.f32 0.0, %v182
    %v217 = vsel %vm212, %v216, -1e+30
    %218 = vst.msk [vmem:[#allocation3 + $0x8] sm:$0xff] %vm214, %v217
    %v219 = vstv %s37
    %v220 = vstv %s38
    %v221 = vsel %vm204, %v219, %v220
    %v222 = vstv %s35
    %v223 = vstv %s36
    %v224 = vsel %vm204, %v222, %v223
    %v225 = vstv %s40
    %v226 = vstv %s41
    %v227 = vsel %vm204, %v225, %v226
    %v228 = vadd.f32 %v182, %v224
    %v229 = vmax.f32 %v228, 0.0
    %v230 = vsel %vm211, %v229, 0.0
    %v231 = vsel %vm211, 1, 0
    %v232 = vcvt.s32.f32 %v231
    %v233 = vstv %s39
    %v234 = vmul.f32 %v233, %v182
    %v235 = vmul.f32 %v234, 1.442695
    %v236 = vpow.pop %v235
    %vm237 = vcmp.lt.f32.partialorder %v182, %v221
    %vm238 = vmand %vm212, %vm237
    %v239 = vmul.f32 %v227, %v236
    %v240 = vsel %vm238, %v239, 0.0
    %v241 = vsub.f32 %v221, %v182
    %v242 = vmul.f32 %v241, %v240
    %243 = vst.msk [vmem:[#allocation2] sm:$0xff] %vm214, %v230
    %244 = vst.msk [vmem:[#allocation2 + $0x8] sm:$0xff] %vm214, %v232
    %245 = vst.msk [vmem:[#allocation2 + $0x10] sm:$0xff] %vm214, %v240
    %246 = vst.msk [vmem:[#allocation2 + $0x18] sm:$0xff] %vm214, %v242
    %vm247 = vcmp.eq.s32.totalorder %v208, %v199
    %v248 = vsel %vm247, 1, 0
    %v249 = vcvt.s32.f32 %v248
    %v250 = vld [vmem:[#allocation2] sm:$0xff]
    %v251 = vld [vmem:[#allocation2 + $0x8] sm:$0xff]
    %v252 = vld [vmem:[#allocation2 + $0x10] sm:$0xff]
    %v253 = vld [vmem:[#allocation2 + $0x18] sm:$0xff]
    %v255 = vsel %vm214, %v250, 0
    %v258 = vsel %vm214, %v251, 0
    %v261 = vsel %vm214, %v252, 0
    %v264 = vsel %vm214, %v253, 0
    %266 = vmatprep.subr.mxu0 0.0
    %267 = vmatpush1.msra.mxu0 %v249
    %268 = vmatprep.subr.mxu0 0.0
    %269 = vmatpush1.msra.mxu0 0.0
    %270 = vmatprep.subr.mxu0 0.0
    %271 = vmatpush1.msra.mxu0 0.0
    %272 = vmatprep.subr.mxu0 0.0
    %273 = vmatpush1.msra.mxu0 0.0
    %274 = vmatprep.subr.mxu0 0.0
    %275 = vmatpush1.msra.mxu0 0.0
    %276 = vmatprep.subr.mxu0 0.0
    %277 = vmatpush1.msra.mxu0 0.0
    %278 = vmatprep.subr.mxu0 0.0
    %279 = vmatpush1.msra.mxu0 0.0
    %280 = vmatprep.subr.mxu0 0.0
    %281 = vmatpush1.msra.mxu0 0.0
    %282 = vmatprep.subr.mxu0 0.0
    %283 = vmatpush1.msra.mxu0 0.0
    %284 = vmatprep.subr.mxu0 0.0
    %285 = vmatpush1.msra.mxu0 0.0
    %286 = vmatprep.subr.mxu0 0.0
    %287 = vmatpush1.msra.mxu0 0.0
    %288 = vmatprep.subr.mxu0 0.0
    %289 = vmatpush1.msra.mxu0 0.0
    %290 = vmatprep.subr.mxu0 0.0
    %291 = vmatpush1.msra.mxu0 0.0
    %292 = vmatprep.subr.mxu0 0.0
    %293 = vmatpush1.msra.mxu0 0.0
    %294 = vmatprep.subr.mxu0 0.0
    %295 = vmatpush1.msra.mxu0 0.0
    %296 = vmatprep.subr.mxu0 0.0
    %297 = vmatpush1.msra.mxu0 0.0
    %298 = vmatprep.subr.mxu0 0.0
    %299 = vmatpush1.msra.mxu0 0.0
    %300 = vmatprep.subr.mxu0 0.0
    %301 = vmatpush1.msra.mxu0 0.0
    %302 = vmatprep.subr.mxu0 0.0
    %303 = vmatpush1.msra.mxu0 0.0
    %304 = vmatprep.subr.mxu0 0.0
    %305 = vmatpush1.msra.mxu0 0.0
    %306 = vmatprep.subr.mxu0 0.0
    %307 = vmatpush1.msra.mxu0 0.0
    %308 = vmatprep.subr.mxu0 0.0
    %309 = vmatpush1.msra.mxu0 0.0
    %310 = vmatprep.subr.mxu0 0.0
    %311 = vmatpush1.msra.mxu0 0.0
    %312 = vmatprep.subr.mxu0 0.0
    %313 = vmatpush1.msra.mxu0 0.0
    %314 = vmatprep.subr.mxu0 0.0
    %315 = vmatpush1.msra.mxu0 0.0
    %316 = vmatprep.subr.mxu0 0.0
    %317 = vmatpush1.msra.mxu0 0.0
    %318 = vmatprep.subr.mxu0 0.0
    %319 = vmatpush1.msra.mxu0 0.0
    %320 = vmatprep.subr.mxu0 0.0
    %321 = vmatpush1.msra.mxu0 0.0
    %322 = vmatprep.subr.mxu0 0.0
    %323 = vmatpush1.msra.mxu0 0.0
    %324 = vmatprep.subr.mxu0 0.0
    %325 = vmatpush1.msra.mxu0 0.0
    %326 = vmatprep.subr.mxu0 0.0
    %327 = vmatpush1.msra.mxu0 0.0
    %328 = vmatprep.subr.mxu0 0.0
    %329 = vmatpush1.msra.mxu0 0.0
    %330 = vmatprep.mubr.f32.mxu0 0.0
    %331 = vmatmul.mubr.f32.gmra.mrb[0].mxu0 %v255
    %v332 = vpop.f32.mrb[0].mxu0
    %v333 = vadd.f32 0.0, %v332
    %v334 = vpop.f32.mrb[0].mxu0
    %335 = vmatprep.mubr.f32.mxu0 0.0
    %336 = vmatmul.mubr.f32.gmra.mrb[0].mxu0 %v258
    %v337 = vpop.f32.mrb[0].mxu0
    %v338 = vadd.f32 0.0, %v337
    %v339 = vpop.f32.mrb[0].mxu0
    %340 = vmatprep.mubr.f32.mxu0 0.0
    %341 = vmatmul.mubr.f32.gmra.mrb[0].mxu0 %v261
    %v342 = vpop.f32.mrb[0].mxu0
    %v343 = vadd.f32 0.0, %v342
    %v344 = vpop.f32.mrb[0].mxu0
    %345 = vmatprep.mubr.f32.mxu0 0.0
    %346 = vmatmul.mubr.f32.gmra.mrb[0].mxu0 %v264
    %v347 = vpop.f32.mrb[0].mxu0
    %v348 = vadd.f32 0.0, %v347
    %v349 = vpop.f32.mrb[0].mxu0
    %350 = vdwg.mxu0
    %vm351 = vcmp.eq.s32.totalorder %v195, 0
    %353 = vrot.lane.b32.xlu0 %v333, 127
    %v354 = vpop.permute.xlu0 %353
    %v356 = vsel %vm351, %v333, %v354
    %v357 = vsel %vm351, %v354, %v333
    %359 = vrot.lane.b32.xlu0 %v338, 127
    %v360 = vpop.permute.xlu0 %359
    %v362 = vsel %vm351, %v338, %v360
    %v363 = vsel %vm351, %v360, %v338
    %365 = vrot.lane.b32.xlu0 %v343, 127
    %v366 = vpop.permute.xlu0 %365
    %v368 = vsel %vm351, %v343, %v366
    %v369 = vsel %vm351, %v366, %v343
    %371 = vrot.lane.b32.xlu0 %v348, 127
    %v372 = vpop.permute.xlu0 %371
    %v374 = vsel %vm351, %v348, %v372
    %v375 = vsel %vm351, %v372, %v348
    %v376 = vadd.f32 %v362, 1e-05
    %v377 = vrcp.pop %v376
    %v378 = vmul.f32 %v356, %v377
    %v379 = vadd.f32 %v363, 1e-05
    %v380 = vrcp.pop %v379
    %v381 = vmul.f32 %v357, %v380
    %v382 = vadd.f32 %v378, %v381
    %v383 = vadd.f32 %v368, 1e-05
    %v384 = vrcp.pop %v383
    %v385 = vmul.f32 %v374, %v384
    %v386 = vadd.f32 %v382, %v385
    %v387 = vadd.f32 %v369, 1e-05
    %v388 = vrcp.pop %v387
    %v389 = vmul.f32 %v375, %v388
    %v390 = vadd.f32 %v386, %v389
    %vm391 = vcmask 7168
    %v392 = vsel %vm391, %v390, 0.0
    %393 = vadd.xlane.f32.xlu0 %v392
    %v394 = vpop.xlane.xlu0 %393
    %v395 = vrot.slane %v394, 4
    %v396 = vadd.f32 %v394, %v395
    %v397 = vrot.slane %v396, 2
    %v398 = vadd.f32 %v396, %v397
    %v399 = vrot.slane %v398, 1
    %v400 = vadd.f32 %v398, %v399
    %s401 = vtos %v400
    %s402 = smul.f32 %s401, 0.125
    %s403 = scalar_lea.smem [#allocation7], 0
    %404 = sst [smem:[%s403]] %s402
    %v405 = vld [vmem:[#allocation3] sm:$0xff]
    %v406 = vld [vmem:[#allocation3 + $0x8] sm:$0xff]
    %v407 = vsel %vm214, %v405, -inf
    %408 = vmax.xlane.f32.xlu0 %v407
    %v409 = vpop.xlane.xlu0 %408
    %v410 = vsel %vm214, %v406, -inf
    %411 = vmax.xlane.f32.xlu0 %v410
    %v412 = vpop.xlane.xlu0 %411
    %v413 = vsub.f32 0.0, %v412
    %vm414 = vcmp.ge.f32.partialorder %v413, %v409
    %v415 = vsel %vm414, 1, 0
    %v416 = vrot.slane %v415, 4
    %v417 = vadd.s32 %v415, %v416
    %v418 = vrot.slane %v417, 2
    %v419 = vadd.s32 %v417, %v418
    %v420 = vrot.slane %v419, 1
    %v421 = vadd.s32 %v419, %v420
    %s422 = vtos %v421
    %s423 = scalar_lea.smem [#allocation8], 0
    %424 = sst [smem:[%s423]] %s422
    // Predicated region
    $region22: #{tpu_custom_call.1} parent=1 // pred_check
      _
    $region23: #{tpu_custom_call.1} parent=1 // pred_check_branch
      %426 = sbr.rel (0) target = $region25
    $region24: #{tpu_custom_call.1} parent=1 // pred_region
      %s428 = ssub.s32 16, 16
      %429 = vsyncadd [#allocation5], %s428
      %432 = dma.smem_to_hbm [#allocation7], 16, %s4, [#allocation5]
    $region25: #{tpu_custom_call.1} parent=1 // pred_fallthru
      _
    // Predicated region
    $region26: #{tpu_custom_call.1} parent=1 // pred_check
      _
    $region27: #{tpu_custom_call.1} parent=1 // pred_check_branch
      %434 = sbr.rel (0) target = $region29
    $region28: #{tpu_custom_call.1} parent=1 // pred_region
      %s436 = ssub.s32 16, 16
      %437 = vsyncadd [#allocation9], %s436
      %440 = dma.smem_to_hbm [#allocation8], 16, %s5, [#allocation9]
    $region29: #{tpu_custom_call.1} parent=1 // pred_fallthru
      _
    // Predicated region
    $region30: #{tpu_custom_call.1} parent=1 // pred_check
      _
    $region31: #{tpu_custom_call.1} parent=1 // pred_check_branch
      %442 = sbr.rel (0) target = $region33
    $region32: #{tpu_custom_call.1} parent=1 // pred_region
      %443 = dma.done [#allocation5], 16
    $region33: #{tpu_custom_call.1} parent=1 // pred_fallthru
      _
    // Predicated region
    $region34: #{tpu_custom_call.1} parent=1 // pred_check
      _
    $region35: #{tpu_custom_call.1} parent=1 // pred_check_branch
      %445 = sbr.rel (0) target = $region37
    $region36: #{tpu_custom_call.1} parent=1 // pred_region
      %446 = dma.done [#allocation9], 16
    $region37: #{tpu_custom_call.1} parent=1 // pred_fallthru
      _
    %447 = sfence
    %448 = vsyncpa [#allocation5], 1
    %449 = vsyncpa [#allocation9], 1
    %450 = vsyncpa [#allocation6], 1

</llo_original>
